<compile_context>
chip_gen: v7x
topology: tpu7x:2x2x1
jax: 0.10.0
libtpu: 0.0.40
codegen_flags: <defaults>
</compile_context>

<pallas_src>
import functools

import jax
import jax.numpy as jnp
from jax.experimental import pallas as pl
from jax.experimental.pallas import tpu as pltpu


def _round_up(x, m):
    return (x + m - 1) // m * m


def _cdiv(a, b):
    return (a + b - 1) // b


def mlp_logsoftmax_kernel(x_ref, w_ref, b_ref, o_ref):
    # Linear layer on the MXU (f32 in / f32 accumulate) + bias.
    logits = jnp.dot(x_ref[...], w_ref[...],
                     preferred_element_type=jnp.float32) + b_ref[...]
    # Numerically-stable log_softmax along the (un-padded) label axis.
    m = jnp.max(logits, axis=-1, keepdims=True)
    z = logits - m
    lse = jnp.log(jnp.sum(jnp.exp(z), axis=-1, keepdims=True))
    o_ref[...] = (z - lse).astype(o_ref.dtype)


def _choose_tm(n, d, c, *, tm_max, vmem_budget=16 << 20):
    """Row tile: biggest 8-aligned tile that fits the VMEM budget, then capped
    for v7x 2-TC load balance (>= ~8 grid steps on large N) without dropping
    below 512 rows/tile (v5e per-step amortization)."""
    n_up = _round_up(max(n, 1), 8)
    # Double-buffered x + out tiles plus ~3 (tm, C) f32 softmax temporaries.
    per_row = 2 * d * 4 + 2 * c * 4 + 3 * c * 4
    resident = 2 * (d * c * 4 + c * 4)            # weight + bias buffers
    avail = max(vmem_budget - resident, 1 << 20)
    tm = max(8, (avail // per_row) // 8 * 8)
    tm = min(tm, tm_max)
    if n_up >= 2 * 512:
        # enough rows for multiple >=512-row tiles: target ~8 grid steps.
        tm = min(tm, max(512, _round_up(_cdiv(n_up, 8), 8)))
    tm = min(tm, n_up)                            # don't over-pad tiny N
    return int(tm)


@functools.partial(jax.jit, static_argnames=("tm_max",))
def downstream_task_forward(node_embedding_matrix, weight, bias, *, tm_max=1024):
    """log_softmax(x @ W + b, axis=1) as a streaming Pallas TPU kernel.

    node_embedding_matrix: (N, D) float32
    weight:                (D, C) float32  (torch Linear.weight transposed)
    bias:                  (C,)   float32
    returns:               (N, C) float32 log-probabilities
    """
    N, D = node_embedding_matrix.shape
    C = weight.shape[1]
    tm = _choose_tm(N, D, C, tm_max=tm_max)
    grid = _cdiv(N, tm)                           # ragged last block is clipped

    x = node_embedding_matrix.astype(jnp.float32)
    w = weight.astype(jnp.float32)
    b = bias.astype(jnp.float32).reshape(1, C)

    # VMEM actually used: double-buffered x/out tiles, resident W/b, softmax temps.
    vmem_need = (2 * (tm * D * 4 + tm * C * 4)
                 + 2 * (D * C * 4 + C * 4)
                 + 3 * tm * C * 4)
    vmem_limit = int(min(max(2 * vmem_need, 8 << 20), 32 << 20))

    cost = pl.CostEstimate(
        flops=2 * N * D * C,
        transcendentals=N * C,
        bytes_accessed=N * D * 4 + N * C * 4 + D * C * 4 + C * 4,
    )

    # TODO(synk): for very large D * C, add a K-tiling grid axis ("arbitrary")
    # with an f32 VMEM accumulator instead of holding the full weight resident.
    out = pl.pallas_call(
        mlp_logsoftmax_kernel,
        out_shape=jax.ShapeDtypeStruct((N, C), jnp.float32),
        grid_spec=pltpu.PrefetchScalarGridSpec(
            num_scalar_prefetch=0,
            grid=(grid,),
            in_specs=[
                pl.BlockSpec((tm, D), lambda i: (i, 0)),    # streamed x rows
                pl.BlockSpec((D, C), lambda i: (0, 0)),     # resident weight
                pl.BlockSpec((1, C), lambda i: (0, 0)),     # resident bias
            ],
            out_specs=pl.BlockSpec((tm, C), lambda i: (i, 0)),
        ),
        compiler_params=pltpu.CompilerParams(
            dimension_semantics=("parallel",),   # shards grid across v7x's 2 TCs
            vmem_limit_bytes=vmem_limit,
        ),
        cost_estimate=cost,
    )(x, w, b)
    return out


class DownstreamTaskPallas:
    """Mirror of autognas DownstreamTask: Linear(gnn_embedding_dim, num_labels)
    followed by log_softmax(dim=1), then transductive-mask selection."""

    def __init__(self, gnn_embedding_dim, num_labels,
                 train_mask, val_mask, test_mask, key):
        kw, kb = jax.random.split(key)
        # torch.nn.Linear default init: U(-1/sqrt(fan_in), 1/sqrt(fan_in))
        bound = 1.0 / (gnn_embedding_dim ** 0.5)
        # stored as (D, C) == torch weight (C, D) transposed
        self.weight = jax.random.uniform(
            kw, (gnn_embedding_dim, num_labels),
            minval=-bound, maxval=bound, dtype=jnp.float32)
        self.bias = jax.random.uniform(
            kb, (num_labels,), minval=-bound, maxval=bound, dtype=jnp.float32)
        # Masks are static graph metadata: precompute the row indices once.
        # Selecting rows first and then running the kernel is identical to
        # log_softmax(full)[mask] because log_softmax is row-wise.
        self.masked_idx = {
            "train": jnp.nonzero(jnp.asarray(train_mask))[0].astype(jnp.int32),
            "val": jnp.nonzero(jnp.asarray(val_mask))[0].astype(jnp.int32),
            "test": jnp.nonzero(jnp.asarray(test_mask))[0].astype(jnp.int32),
        }

    def __call__(self, node_embedding_matrix, batch_x_index=None, mode="train"):
        # batch_x_index is unused by the reference forward (kept for parity).
        if mode not in self.masked_idx:
            raise ValueError("wrong mode")
        idx = self.masked_idx[mode]
        x_sel = jnp.take(node_embedding_matrix, idx, axis=0)
        return downstream_task_forward(x_sel, self.weight, self.bias)


if __name__ == "__main__":
    key = jax.random.PRNGKey(0)
    k_emb, k_params = jax.random.split(key)

    N = 32            # number of nodes
    D = 32            # gnn_embedding_dim
    C = 8             # num_labels

    node_embedding_matrix = jax.random.normal(k_emb, (N, D), dtype=jnp.float32)
    batch_x_index = jnp.arange(N, dtype=jnp.int32)

    # deterministic transductive split masks
    idx = jnp.arange(N)
    train_mask = idx < 16
    val_mask = (idx >= 16) & (idx < 24)
    test_mask = idx >= 24

    model = DownstreamTaskPallas(D, C, train_mask, val_mask, test_mask, k_params)

    out_train = model(node_embedding_matrix, batch_x_index, mode="train")
    out_val = model(node_embedding_matrix, batch_x_index, mode="val")
    out_test = model(node_embedding_matrix, batch_x_index, mode="test")
    jax.block_until_ready((out_train, out_val, out_test))

    # Pure-f32 reference (tolerance covers MXU pass-rounding differences).
    ref = jax.nn.log_softmax(
        node_embedding_matrix @ model.weight + model.bias, axis=1)
    full = downstream_task_forward(node_embedding_matrix, model.weight, model.bias)
    jax.block_until_ready(full)
    assert full.shape == (N, C)
    assert jnp.allclose(full, ref, atol=2e-2, rtol=2e-2)
    assert out_train.shape == (16, C)
    assert jnp.allclose(out_train, ref[train_mask], atol=2e-2, rtol=2e-2)
    assert jnp.allclose(out_val, ref[val_mask], atol=2e-2, rtol=2e-2)
    assert jnp.allclose(out_test, ref[test_mask], atol=2e-2, rtol=2e-2)

    # Exercise the ragged, multi-step grid path (N not a multiple of the tile).
    N2 = 50
    x2 = jax.random.normal(jax.random.PRNGKey(1), (N2, D), dtype=jnp.float32)
    out2 = downstream_task_forward(x2, model.weight, model.bias, tm_max=16)
    jax.block_until_ready(out2)
    ref2 = jax.nn.log_softmax(x2 @ model.weight + model.bias, axis=1)
    assert out2.shape == (N2, C)
    assert jnp.allclose(out2, ref2, atol=2e-2, rtol=2e-2)

    print("KERNEL_OK")
</pallas_src>

<mosaic_0001>
module attributes {stable_mosaic.version = 11 : i64} {
  func.func @mlp_logsoftmax_kernel(%arg0: i32, %arg1: memref<16x32xf32, #tpu.memory_space<vmem>>, %arg2: memref<32x8xf32, #tpu.memory_space<vmem>>, %arg3: memref<1x8xf32, #tpu.memory_space<vmem>>, %arg4: memref<16x8xf32, #tpu.memory_space<vmem>>) attributes {dimension_semantics = [#tpu.dimension_semantics<parallel>], iteration_bounds = array<i64: 1>, scalar_prefetch = 0 : i64, scratch_operands = 0 : i64, tpu.core_type = #tpu.core_type<tc>, window_params = [{transform_indices = @transform_0, window_bounds = array<i64: 16, 32>}, {pipeline_mode = #tpu.pipeline_mode<synchronous>, transform_indices = @transform_1, window_bounds = array<i64: 32, 8>}, {pipeline_mode = #tpu.pipeline_mode<synchronous>, transform_indices = @transform_2, window_bounds = array<i64: 1, 8>}, {transform_indices = @transform_3, window_bounds = array<i64: 16, 8>}]} {
    %c0 = arith.constant 0 : index
    %c0_0 = arith.constant 0 : index
    %0 = vector.load %arg1[%c0, %c0_0] : memref<16x32xf32, #tpu.memory_space<vmem>>, vector<16x32xf32>
    %c0_1 = arith.constant 0 : index
    %c0_2 = arith.constant 0 : index
    %1 = vector.load %arg2[%c0_1, %c0_2] : memref<32x8xf32, #tpu.memory_space<vmem>>, vector<32x8xf32>
    %cst = arith.constant dense<0.000000e+00> : vector<16x8xf32>
    %2 = tpu.matmul %0, %1, %cst {dimension_numbers = #tpu.dot_dimension_numbers<[1], [0], [0], [1], [0, 0, 1, 1], [], []>} : vector<16x32xf32>, vector<32x8xf32>, vector<16x8xf32> -> vector<16x8xf32>
    %c0_3 = arith.constant 0 : index
    %c0_4 = arith.constant 0 : index
    %3 = vector.load %arg3[%c0_3, %c0_4] : memref<1x8xf32, #tpu.memory_space<vmem>>, vector<1x8xf32>
    %4 = vector.broadcast %3 : vector<1x8xf32> to vector<16x8xf32>
    %5 = arith.addf %2, %4 : vector<16x8xf32>
    %cst_5 = arith.constant dense<0xFF800000> : vector<16xf32>
    %6 = vector.multi_reduction <maximumf>, %5, %cst_5 [1] : vector<16x8xf32> to vector<16xf32>
    %7 = vector.shape_cast %6 : vector<16xf32> to vector<16x1xf32>
    %8 = vector.broadcast %7 : vector<16x1xf32> to vector<16x8xf32>
    %9 = arith.subf %5, %8 : vector<16x8xf32>
    %10 = math.exp %9 : vector<16x8xf32>
    %cst_6 = arith.constant dense<0.000000e+00> : vector<16xf32>
    %11 = vector.multi_reduction <add>, %10, %cst_6 [1] : vector<16x8xf32> to vector<16xf32>
    %12 = vector.shape_cast %11 : vector<16xf32> to vector<16x1xf32>
    %13 = math.log %12 : vector<16x1xf32>
    %14 = vector.broadcast %13 : vector<16x1xf32> to vector<16x8xf32>
    %15 = arith.subf %9, %14 : vector<16x8xf32>
    %c0_7 = arith.constant 0 : index
    %c0_8 = arith.constant 0 : index
    %16 = vector.load %arg4[%c0_7, %c0_8] : memref<16x8xf32, #tpu.memory_space<vmem>>, vector<16x8xf32>
    tpu.vector_store %arg4[%c0_7, %c0_8], %15 {strides = array<i32>} : memref<16x8xf32, #tpu.memory_space<vmem>>, vector<16x8xf32>,
    return
  }
  func.func @transform_0(%arg0: i32) -> (i32, i32) {
    %c0_i32 = arith.constant 0 : i32
    %c0_i32_0 = arith.constant 0 : i32
    return %arg0, %c0_i32 : i32, i32
  }
  func.func @transform_1(%arg0: i32) -> (i32, i32) {
    %c0_i32 = arith.constant 0 : i32
    %c0_i32_0 = arith.constant 0 : i32
    %c0_i32_1 = arith.constant 0 : i32
    return %c0_i32, %c0_i32_0 : i32, i32
  }
  func.func @transform_2(%arg0: i32) -> (i32, i32) {
    %c0_i32 = arith.constant 0 : i32
    %c0_i32_0 = arith.constant 0 : i32
    %c0_i32_1 = arith.constant 0 : i32
    return %c0_i32, %c0_i32_0 : i32, i32
  }
  func.func @transform_3(%arg0: i32) -> (i32, i32) {
    %c0_i32 = arith.constant 0 : i32
    %c0_i32_0 = arith.constant 0 : i32
    return %arg0, %c0_i32 : i32, i32
  }
}

</mosaic_0001>

<llo_original>
// kernel: downstream_task_forward.1
$region0: #{downstream_task_forward.1}
  #allocation0 [shape = 'u32[]', space=smem, size = 0x4, offset = 0x4, fixed_abs, tag = 'smem constant byte address 0x4 - core index']
  #allocation1 [shape = 'u32[144,128]{1,0:T(1,128)}', space=vmem, size = 0x12000, scoped, tag = 'internal scratch']
  %s0 = inlined_call_operand.vmem [shape: f32[16,32], index: 0, kind: input, shape index: {}]
  %s1 = inlined_call_operand.vmem [shape: f32[32,8], index: 1, kind: input, shape index: {}]
  %s2 = inlined_call_operand.vmem [shape: f32[1,8], index: 2, kind: input, shape index: {}]
  %s3 = inlined_call_operand.vmem [shape: f32[16,8], index: 3, kind: output, shape index: {}]
  %s4 = sld [smem:[#allocation0]]
  $region22: #{downstream_task_forward.1} parent=0
    _
  %s6 = ssub.s32 1, %s4
  %s7 = scalar_select 0, %s6, %s4
  // Predicated region
  $region2: #{downstream_task_forward.1} parent=0 // pred_check
    _
  $region3: #{downstream_task_forward.1} parent=0 // pred_check_branch
    %9 = sbr.rel (0) target = $region5
  $region4: #{downstream_task_forward.1} parent=0 // pred_region
    _
  $region5: #{downstream_task_forward.1} parent=0 // pred_fallthru
    _
  // Predicated region
  $region6: #{downstream_task_forward.1} parent=0 // pred_check
    _
  $region7: #{downstream_task_forward.1} parent=0 // pred_check_branch
    %11 = sbr.rel (0) target = $region9
  $region8: #{downstream_task_forward.1} parent=0 // pred_region
    _
  $region9: #{downstream_task_forward.1} parent=0 // pred_fallthru
    _
  // Predicated region
  $region10: #{downstream_task_forward.1} parent=0 // pred_check
    _
  $region11: #{downstream_task_forward.1} parent=0 // pred_check_branch
    %13 = sbr.rel (0) target = $region13
  $region12: #{downstream_task_forward.1} parent=0 // pred_region
    _
  $region13: #{downstream_task_forward.1} parent=0 // pred_fallthru
    _
  %v14 = vld [vmem:[%s0] sm:$0xff]
  %v15 = vld [vmem:[%s0 + $0x8] sm:$0xff]
  %v16 = vld [vmem:[%s1] sm:$0xff]
  %v17 = vld [vmem:[%s1 + $0x8] sm:$0xff]
  %v18 = vld [vmem:[%s1 + $0x10] sm:$0xff]
  %v19 = vld [vmem:[%s1 + $0x18] sm:$0xff]
  %v20 = vld [vmem:[%s2] sm:$0x1]
  %v22 = vlaneseq
  %v23 = vshrl.u32 %v22, 7
  %v24 = vsub.s32 0, %v23
  %v25 = vrot.slane %v20, %v24
  %vm27 = vcmask 261120
  %v29 = vsel %vm27, %v14, 0
  %v32 = vsel %vm27, %v15, 0
  %34 = vmatprep.subr.mxu0 0.0
  %35 = vmatpush1.msra.mxu0 %v16
  %36 = vmatprep.subr.mxu0 0.0
  %37 = vmatpush1.msra.mxu0 %v17
  %38 = vmatprep.subr.mxu0 0.0
  %39 = vmatpush1.msra.mxu0 %v18
  %40 = vmatprep.subr.mxu0 0.0
  %41 = vmatpush1.msra.mxu0 %v19
  %42 = vmatprep.subr.mxu0 0.0
  %43 = vmatpush1.msra.mxu0 0.0
  %44 = vmatprep.subr.mxu0 0.0
  %45 = vmatpush1.msra.mxu0 0.0
  %46 = vmatprep.subr.mxu0 0.0
  %47 = vmatpush1.msra.mxu0 0.0
  %48 = vmatprep.subr.mxu0 0.0
  %49 = vmatpush1.msra.mxu0 0.0
  %50 = vmatprep.subr.mxu0 0.0
  %51 = vmatpush1.msra.mxu0 0.0
  %52 = vmatprep.subr.mxu0 0.0
  %53 = vmatpush1.msra.mxu0 0.0
  %54 = vmatprep.subr.mxu0 0.0
  %55 = vmatpush1.msra.mxu0 0.0
  %56 = vmatprep.subr.mxu0 0.0
  %57 = vmatpush1.msra.mxu0 0.0
  %58 = vmatprep.subr.mxu0 0.0
  %59 = vmatpush1.msra.mxu0 0.0
  %60 = vmatprep.subr.mxu0 0.0
  %61 = vmatpush1.msra.mxu0 0.0
  %62 = vmatprep.subr.mxu0 0.0
  %63 = vmatpush1.msra.mxu0 0.0
  %64 = vmatprep.subr.mxu0 0.0
  %65 = vmatpush1.msra.mxu0 0.0
  %66 = vmatprep.subr.mxu0 0.0
  %67 = vmatpush1.msra.mxu0 0.0
  %68 = vmatprep.subr.mxu0 0.0
  %69 = vmatpush1.msra.mxu0 0.0
  %70 = vmatprep.subr.mxu0 0.0
  %71 = vmatpush1.msra.mxu0 0.0
  %72 = vmatprep.subr.mxu0 0.0
  %73 = vmatpush1.msra.mxu0 0.0
  %74 = vmatprep.subr.mxu0 0.0
  %75 = vmatpush1.msra.mxu0 0.0
  %76 = vmatprep.subr.mxu0 0.0
  %77 = vmatpush1.msra.mxu0 0.0
  %78 = vmatprep.subr.mxu0 0.0
  %79 = vmatpush1.msra.mxu0 0.0
  %80 = vmatprep.subr.mxu0 0.0
  %81 = vmatpush1.msra.mxu0 0.0
  %82 = vmatprep.subr.mxu0 0.0
  %83 = vmatpush1.msra.mxu0 0.0
  %84 = vmatprep.subr.mxu0 0.0
  %85 = vmatpush1.msra.mxu0 0.0
  %86 = vmatprep.subr.mxu0 0.0
  %87 = vmatpush1.msra.mxu0 0.0
  %88 = vmatprep.subr.mxu0 0.0
  %89 = vmatpush1.msra.mxu0 0.0
  %90 = vmatprep.subr.mxu0 0.0
  %91 = vmatpush1.msra.mxu0 0.0
  %92 = vmatprep.subr.mxu0 0.0
  %93 = vmatpush1.msra.mxu0 0.0
  %94 = vmatprep.subr.mxu0 0.0
  %95 = vmatpush1.msra.mxu0 0.0
  %96 = vmatprep.subr.mxu0 0.0
  %97 = vmatpush1.msra.mxu0 0.0
  %98 = vmatprep.mubr.f32.mxu0 0.0
  %99 = vmatmul.mubr.f32.gmra.mrb[0].mxu0 %v29
  %v100 = vpop.f32.mrb[0].mxu0
  %v101 = vadd.f32 %v25, %v100
  %v102 = vpop.f32.mrb[0].mxu0
  %103 = vmatprep.mubr.f32.mxu0 0.0
  %104 = vmatmul.mubr.f32.gmra.mrb[0].mxu0 %v32
  %v105 = vpop.f32.mrb[0].mxu0
  %v106 = vadd.f32 %v25, %v105
  %v107 = vpop.f32.mrb[0].mxu0
  %108 = vdwg.mxu0
  %vm109 = vcmask 64512
  %v110 = vsel %vm109, %v101, -inf
  %111 = vmax.xlane.f32.xlu0 %v110
  %v112 = vpop.xlane.xlu0 %111
  %v113 = vsel %vm109, %v106, -inf
  %114 = vmax.xlane.f32.xlu0 %v113
  %v115 = vpop.xlane.xlu0 %114
  %v116 = vsub.f32 %v101, %v112
  %v117 = vsub.f32 %v106, %v115
  %v118 = vmul.f32 %v116, 1.442695
  %v119 = vpow.pop %v118
  %v120 = vmul.f32 %v117, 1.442695
  %v121 = vpow.pop %v120
  %v122 = vsel %vm109, %v119, 0.0
  %123 = vadd.xlane.f32.xlu0 %v122
  %v124 = vpop.xlane.xlu0 %123
  %v125 = vsel %vm109, %v121, 0.0
  %126 = vadd.xlane.f32.xlu0 %v125
  %v127 = vpop.xlane.xlu0 %126
  %v128 = vlog2.pop %v124
  %v129 = vmul.f32 %v128, 0.6931472
  %v130 = vlog2.pop %v127
  %v131 = vmul.f32 %v130, 0.6931472
  %v132 = vsub.f32 %v116, %v129
  %v133 = vsub.f32 %v117, %v131
  %134 = vst.msk [vmem:[%s3] sm:$0xff] %vm109, %v132
  %135 = vst.msk [vmem:[%s3 + $0x8] sm:$0xff] %vm109, %v133
  // Predicated region
  $region14: #{downstream_task_forward.1} parent=0 // pred_check
    _
  $region15: #{downstream_task_forward.1} parent=0 // pred_check_branch
    %137 = sbr.rel (0) target = $region17
  $region16: #{downstream_task_forward.1} parent=0 // pred_region
    _
  $region17: #{downstream_task_forward.1} parent=0 // pred_fallthru
    _
  // Predicated region
  $region18: #{downstream_task_forward.1} parent=0 // pred_check
    _
  $region19: #{downstream_task_forward.1} parent=0 // pred_check_branch
    %139 = sbr.rel (0) target = $region21
  $region20: #{downstream_task_forward.1} parent=0 // pred_region
    _
  $region21: #{downstream_task_forward.1} parent=0 // pred_fallthru
    _

</llo_original>
